<compile_context>
chip_gen: v7x
topology: tpu7x:2x2x1
jax: 0.10.0
libtpu: 0.0.40
codegen_flags: <defaults>
</compile_context>

<pallas_src>
import functools

import jax
import jax.numpy as jnp
from jax.experimental import pallas as pl
from jax.experimental.pallas import tpu as pltpu


# ----------------------------------------------------------------------------
# Dense operator construction (only used for to_matrix() / reference checks)
# ----------------------------------------------------------------------------
def build_projector_op(n_qubit: int, basis: int, index: int) -> jnp.ndarray:
    assert basis in (0, 1), "basis must be 0 or 1"
    id1 = jnp.eye(2 ** index, dtype=jnp.float32)
    id2 = jnp.eye(2 ** (n_qubit - index - 1), dtype=jnp.float32)
    if basis == 0:
        proj = jnp.array([[1.0, 0.0], [0.0, 0.0]], dtype=jnp.float32)
    else:
        proj = jnp.array([[0.0, 0.0], [0.0, 1.0]], dtype=jnp.float32)
    return functools.reduce(jnp.kron, [id1, proj, id2])  # (2**n, 2**n)


# ----------------------------------------------------------------------------
# Tiling helper: clamp to preferred tile, aligned; ragged last block is fine.
# ----------------------------------------------------------------------------
def _pick_tile(dim: int, pref: int, align: int) -> int:
    if dim <= pref:
        return dim                       # full extent is always a legal block
    t = (pref // align) * align          # aligned tile <= pref
    return max(t, align)


# ----------------------------------------------------------------------------
# Kernels
# ----------------------------------------------------------------------------
def _mask_kernel(x0_ref, x1_ref, y0_ref, y1_ref, *, bit_shift, basis, td):
    # Per-lane mask path: the keep-bit varies within this column tile.
    j = pl.program_id(1)                                  # column-block index
    col = j * td + jax.lax.broadcasted_iota(jnp.int32, (1, x0_ref.shape[-1]), 1)
    keep = ((col >> bit_shift) & 1) == basis              # (1, td) bool, bcast rows
    zero = jnp.zeros((), dtype=x0_ref.dtype)
    y0_ref[...] = jnp.where(keep, x0_ref[...], zero)
    y1_ref[...] = jnp.where(keep, x1_ref[...], zero)


def _block_uniform_kernel(x0_ref, x1_ref, y0_ref, y1_ref, *, g, basis):
    # Whole column tile is either kept or zeroed (td <= 2^bit_shift).
    j = pl.program_id(1)
    keep = ((j // g) % 2) == basis

    @pl.when(keep)
    def _():
        y0_ref[...] = x0_ref[...]
        y1_ref[...] = x1_ref[...]

    @pl.when(jnp.logical_not(keep))
    def _():
        y0_ref[...] = jnp.zeros_like(y0_ref)
        y1_ref[...] = jnp.zeros_like(y1_ref)


# ----------------------------------------------------------------------------
# Pallas entry point
# ----------------------------------------------------------------------------
def projector_apply(x0: jnp.ndarray, x1: jnp.ndarray, *, n_qubit: int,
                    basis: int, index: int, tm_pref: int = 256,
                    td_pref: int = 1024):
    M, D = x0.shape
    assert x1.shape == (M, D)
    assert D == 2 ** n_qubit, "state dimension must be 2**n_qubit"
    assert basis in (0, 1)
    assert 0 <= index < n_qubit

    bit_shift = n_qubit - index - 1
    tm = _pick_tile(M, tm_pref, 8)       # row tile (multiple of 8 or full extent)
    td = _pick_tile(D, td_pref, 128)     # lane-dense column tile (multiple of 128)
    grid = (pl.cdiv(M, tm), pl.cdiv(D, td))

    period_cols = 1 << bit_shift         # run-length of a constant keep-bit
    block_uniform = td <= period_cols    # powers of two => td divides the run

    out_spec = pl.BlockSpec((tm, td), lambda i, j: (i, j))
    itemsize = jnp.dtype(x0.dtype).itemsize
    write_bytes = 2 * M * D * itemsize

    if block_uniform:
        g = period_cols // td            # column blocks per constant-bit run
        period = 2 * g

        if basis == 0:
            # keep groups: [k*period, k*period+g) ; dropped -> last kept of run
            def in_map(i, j):
                k = j // period
                r = j - k * period
                return (i, jnp.where(r < g, j, k * period + g - 1))
        else:
            # keep groups: [k*period+g, (k+1)*period) ; dropped -> first kept of run
            def in_map(i, j):
                k = j // period
                r = j - k * period
                return (i, jnp.where(r >= g, j, k * period + g))

        in_spec = pl.BlockSpec((tm, td), in_map)
        kernel = functools.partial(_block_uniform_kernel, g=g, basis=basis)
        read_bytes = M * D * itemsize            # only the kept half is fetched
    else:
        in_spec = pl.BlockSpec((tm, td), lambda i, j: (i, j))
        kernel = functools.partial(_mask_kernel, bit_shift=bit_shift,
                                   basis=basis, td=td)
        read_bytes = 2 * M * D * itemsize

    return pl.pallas_call(
        kernel,
        out_shape=(
            jax.ShapeDtypeStruct((M, D), x0.dtype),
            jax.ShapeDtypeStruct((M, D), x1.dtype),
        ),
        grid=grid,
        in_specs=[in_spec, in_spec],
        out_specs=(out_spec, out_spec),
        compiler_params=pltpu.CompilerParams(
            dimension_semantics=("parallel", "arbitrary")),
        cost_estimate=pl.CostEstimate(
            flops=0, transcendentals=0,
            bytes_accessed=read_bytes + write_bytes),
    )(x0, x1)


# ----------------------------------------------------------------------------
# Module-equivalent wrapper
# ----------------------------------------------------------------------------
class ProjectorPallas:
    def __init__(self, n_qubit: int, basis: int, index: int):
        assert basis in (0, 1), "basis must be 0 or 1"
        assert 0 <= index < n_qubit
        self.n_qubit = n_qubit
        self.basis = basis
        self.index = index

    def __call__(self, x: tuple):
        x0, x1 = x
        return projector_apply(
            x0, x1, n_qubit=self.n_qubit, basis=self.basis, index=self.index
        )

    def to_matrix(self):
        # Dense (2^n, 2^n) operator, built lazily only when requested.
        return build_projector_op(self.n_qubit, self.basis, self.index)


if __name__ == "__main__":
    key = jax.random.PRNGKey(0)
    ok = True

    # Case A: per-lane mask path (n_qubit=7 -> D=128, single column block).
    n_qubit = 7
    D = 2 ** n_qubit
    M = 8
    k0, k1 = jax.random.split(key)
    x0 = jax.random.normal(k0, (M, D), dtype=jnp.float32)
    x1 = jax.random.normal(k1, (M, D), dtype=jnp.float32)
    for basis, index in [(0, 3), (1, 5), (1, 0), (0, 6)]:
        mod = ProjectorPallas(n_qubit, basis, index)
        op = mod.to_matrix()
        y0, y1 = mod((x0, x1))
        y0 = jax.block_until_ready(y0)
        y1 = jax.block_until_ready(y1)
        ok &= bool(jnp.allclose(y0, x0 @ op, atol=1e-6))
        ok &= bool(jnp.allclose(y1, x1 @ op, atol=1e-6))

    # Case B: block-uniform path with input-DMA elision (td <= 2^bit_shift),
    # including a ragged row tile (M=24 with tm=16) and the per-lane fallback
    # across multiple column blocks (index=1).
    n_qubit = 8
    D = 2 ** n_qubit
    M = 24
    k2, k3 = jax.random.split(k1)
    x0 = jax.random.normal(k2, (M, D), dtype=jnp.float32)
    x1 = jax.random.normal(k3, (M, D), dtype=jnp.float32)
    for basis, index in [(0, 0), (1, 0), (0, 1)]:
        op = build_projector_op(n_qubit, basis, index)
        y0, y1 = projector_apply(x0, x1, n_qubit=n_qubit, basis=basis,
                                 index=index, tm_pref=16, td_pref=128)
        y0 = jax.block_until_ready(y0)
        y1 = jax.block_until_ready(y1)
        ok &= bool(jnp.allclose(y0, x0 @ op, atol=1e-6))
        ok &= bool(jnp.allclose(y1, x1 @ op, atol=1e-6))

    assert ok, "Pallas projector mismatch vs x @ op reference"
    print("KERNEL_OK")
</pallas_src>

<mosaic_0001>
module attributes {stable_mosaic.version = 11 : i64} {
  func.func @_mask_kernel(%arg0: i32, %arg1: i32, %arg2: memref<8x128xf32, #tpu.memory_space<vmem>>, %arg3: memref<8x128xf32, #tpu.memory_space<vmem>>, %arg4: memref<8x128xf32, #tpu.memory_space<vmem>>, %arg5: memref<8x128xf32, #tpu.memory_space<vmem>>) attributes {dimension_semantics = [#tpu.dimension_semantics<parallel>, #tpu.dimension_semantics<arbitrary>], iteration_bounds = array<i64: 1, 1>, scalar_prefetch = 0 : i64, scratch_operands = 0 : i64, tpu.core_type = #tpu.core_type<tc>, window_params = [{transform_indices = @transform_0, window_bounds = array<i64: 8, 128>}, {transform_indices = @transform_1, window_bounds = array<i64: 8, 128>}, {transform_indices = @transform_2, window_bounds = array<i64: 8, 128>}, {transform_indices = @transform_3, window_bounds = array<i64: 8, 128>}]} {
    %c128_i32 = arith.constant 128 : i32
    %0 = arith.muli %arg1, %c128_i32 : i32
    %1 = tpu.iota {dimensions = array<i32: 1>} : vector<1x128xi32>
    %2 = vector.broadcast %0 : i32 to vector<1x128xi32>
    %3 = arith.addi %2, %1 : vector<1x128xi32>
    %c3_i32 = arith.constant 3 : i32
    %4 = vector.broadcast %c3_i32 : i32 to vector<1x128xi32>
    %5 = arith.shrsi %3, %4 : vector<1x128xi32>
    %c1_i32 = arith.constant 1 : i32
    %6 = vector.broadcast %c1_i32 : i32 to vector<1x128xi32>
    %7 = arith.andi %5, %6 : vector<1x128xi32>
    %c0_i32 = arith.constant 0 : i32
    %8 = vector.broadcast %c0_i32 : i32 to vector<1x128xi32>
    %9 = arith.cmpi eq, %7, %8 : vector<1x128xi32>
    %c0 = arith.constant 0 : index
    %c0_0 = arith.constant 0 : index
    %10 = vector.load %arg2[%c0, %c0_0] : memref<8x128xf32, #tpu.memory_space<vmem>>, vector<8x128xf32>
    %cst = arith.constant 0.000000e+00 : f32
    %11 = vector.shape_cast %9 : vector<1x128xi1> to vector<1x128xi1>
    %12 = vector.broadcast %11 : vector<1x128xi1> to vector<8x128xi1>
    %13 = vector.broadcast %cst : f32 to vector<8x128xf32>
    %14 = arith.select %12, %10, %13 : vector<8x128xi1>, vector<8x128xf32>
    %c0_1 = arith.constant 0 : index
    %c0_2 = arith.constant 0 : index
    %15 = vector.load %arg4[%c0_1, %c0_2] : memref<8x128xf32, #tpu.memory_space<vmem>>, vector<8x128xf32>
    tpu.vector_store %arg4[%c0_1, %c0_2], %14 {strides = array<i32>} : memref<8x128xf32, #tpu.memory_space<vmem>>, vector<8x128xf32>,
    %c0_3 = arith.constant 0 : index
    %c0_4 = arith.constant 0 : index
    %16 = vector.load %arg3[%c0_3, %c0_4] : memref<8x128xf32, #tpu.memory_space<vmem>>, vector<8x128xf32>
    %cst_5 = arith.constant 0.000000e+00 : f32
    %17 = vector.shape_cast %9 : vector<1x128xi1> to vector<1x128xi1>
    %18 = vector.broadcast %17 : vector<1x128xi1> to vector<8x128xi1>
    %19 = vector.broadcast %cst_5 : f32 to vector<8x128xf32>
    %20 = arith.select %18, %16, %19 : vector<8x128xi1>, vector<8x128xf32>
    %c0_6 = arith.constant 0 : index
    %c0_7 = arith.constant 0 : index
    %21 = vector.load %arg5[%c0_6, %c0_7] : memref<8x128xf32, #tpu.memory_space<vmem>>, vector<8x128xf32>
    tpu.vector_store %arg5[%c0_6, %c0_7], %20 {strides = array<i32>} : memref<8x128xf32, #tpu.memory_space<vmem>>, vector<8x128xf32>,
    return
  }
  func.func @transform_0(%arg0: i32, %arg1: i32) -> (i32, i32) {
    %c0_i32 = arith.constant 0 : i32
    return %arg0, %arg1 : i32, i32
  }
  func.func @transform_1(%arg0: i32, %arg1: i32) -> (i32, i32) {
    %c0_i32 = arith.constant 0 : i32
    return %arg0, %arg1 : i32, i32
  }
  func.func @transform_2(%arg0: i32, %arg1: i32) -> (i32, i32) {
    %c0_i32 = arith.constant 0 : i32
    return %arg0, %arg1 : i32, i32
  }
  func.func @transform_3(%arg0: i32, %arg1: i32) -> (i32, i32) {
    %c0_i32 = arith.constant 0 : i32
    return %arg0, %arg1 : i32, i32
  }
}

</mosaic_0001>

<llo_original>
// kernel: tpu_custom_call.1
$region0: #{tpu_custom_call.1}
  #allocation0 [shape = 'u32[]', space=smem, size = 0x4, offset = 0x4, fixed_abs, tag = 'smem constant byte address 0x4 - core index']
  #allocation1 [shape = 'u32[144,128]{1,0:T(1,128)}', space=vmem, size = 0x12000, scoped, tag = 'internal scratch']
  %s0 = inlined_call_operand.hbm [shape: f32[8,128], index: 0, kind: input, shape index: {}]
  %s1 = inlined_call_operand.hbm [shape: f32[8,128], index: 1, kind: input, shape index: {}]
  %s2 = inlined_call_operand.hbm [shape: f32[8,128], index: 2, kind: output, shape index: {0}]
  %s3 = inlined_call_operand.hbm [shape: f32[8,128], index: 3, kind: output, shape index: {1}]
  %4 = xla_tuple %s2, %s3
  %s5 = sld [smem:[#allocation0]]
  $region34: #{tpu_custom_call.1} parent=0
    _
  %s7 = ssub.s32 1, %s5
  %s8 = scalar_select 0, %s7, %s5
  $region1: #{tpu_custom_call.1} parent=0
    #allocation2 [shape = 'u8[4096]{0}', space=vmem, size = 0x1000, scoped, tag = 'input window, operand 0, single buffered']
    #allocation3 [shape = 's32[1]{0}', space=sflag, size = 0x4, scoped, tag = 'scoped memory for tpu_custom_call.1']
    #allocation4 [shape = 's32[1]{0}', space=sflag, size = 0x4, scoped, tag = 'scoped memory for tpu_custom_call.1']
    #allocation5 [shape = 'u8[4096]{0}', space=vmem, size = 0x1000, scoped, tag = 'input window, operand 1, single buffered']
    #allocation6 [shape = 's32[1]{0}', space=sflag, size = 0x4, scoped, tag = 'scoped memory for tpu_custom_call.1']
    #allocation7 [shape = 'u8[4096]{0}', space=vmem, size = 0x1000, scoped, tag = 'output window, operand 0, single buffered']
    #allocation8 [shape = 'u8[4096]{0}', space=vmem, size = 0x1000, scoped, tag = 'output window, operand 1, single buffered']
    #allocation9 [shape = 's32[1]{0}', space=sflag, size = 0x4, scoped, tag = 'scoped memory for tpu_custom_call.1']
    %9 = vsyncpa [#allocation3], 0
    %10 = vsyncpa [#allocation6], 0
    %11 = vsyncpa [#allocation4], 0
    %12 = vsyncpa [#allocation9], 0
    // Predicated region
    $region2: #{tpu_custom_call.1} parent=1 // pred_check
      _
    $region3: #{tpu_custom_call.1} parent=1 // pred_check_branch
      %14 = sbr.rel (0) target = $region5
    $region4: #{tpu_custom_call.1} parent=1 // pred_region
      %s16 = ssub.s32 128, 128
      %17 = vsyncadd [#allocation3], %s16
      %s19 = sshll.u32 [#allocation2], 4
      %s20 = int_to_ptr.vmem [resolvable:$true] %s19
      %22 = dma.hbm_to_vmem [thread:$0]  %s0, 128, %s20, [#allocation3]
    $region5: #{tpu_custom_call.1} parent=1 // pred_fallthru
      _
    // Predicated region
    $region6: #{tpu_custom_call.1} parent=1 // pred_check
      _
    $region7: #{tpu_custom_call.1} parent=1 // pred_check_branch
      %24 = sbr.rel (0) target = $region9
    $region8: #{tpu_custom_call.1} parent=1 // pred_region
      %s26 = ssub.s32 128, 128
      %27 = vsyncadd [#allocation6], %s26
      %s29 = sshll.u32 [#allocation5], 4
      %s30 = int_to_ptr.vmem [resolvable:$true] %s29
      %32 = dma.hbm_to_vmem [thread:$0]  %s1, 128, %s30, [#allocation6]
    $region9: #{tpu_custom_call.1} parent=1 // pred_fallthru
      _
    // Predicated region
    $region10: #{tpu_custom_call.1} parent=1 // pred_check
      _
    $region11: #{tpu_custom_call.1} parent=1 // pred_check_branch
      %34 = sbr.rel (0) target = $region13
    $region12: #{tpu_custom_call.1} parent=1 // pred_region
      %35 = dma.done [#allocation3], 128
    $region13: #{tpu_custom_call.1} parent=1 // pred_fallthru
      _
    // Predicated region
    $region14: #{tpu_custom_call.1} parent=1 // pred_check
      _
    $region15: #{tpu_custom_call.1} parent=1 // pred_check_branch
      %37 = sbr.rel (0) target = $region17
    $region16: #{tpu_custom_call.1} parent=1 // pred_region
      %38 = dma.done [#allocation6], 128
    $region17: #{tpu_custom_call.1} parent=1 // pred_fallthru
      _
    %s39 = smul.u32 0, 128
    %v40 = vlaneseq
    %v41 = vand.u32 %v40, 127
    %v42 = vstv %s39
    %v43 = vadd.s32 %v42, %v41
    %v44 = vshra.s32 %v43, 3
    %v45 = vand.u32 %v44, 1
    %vm46 = vcmp.eq.s32.totalorder %v45, 0
    %v47 = vld [vmem:[#allocation2] sm:$0xff]
    %v48 = vsel %vm46, 1, 0
    %vm49 = vcmp.eq.s32.totalorder %v48, 1
    %v50 = vsel %vm49, %v47, 0.0
    %51 = vst [vmem:[#allocation7] sm:$0xff] %v50
    %v52 = vld [vmem:[#allocation5] sm:$0xff]
    %v53 = vsel %vm49, %v52, 0.0
    %54 = vst [vmem:[#allocation8] sm:$0xff] %v53
    // Predicated region
    $region18: #{tpu_custom_call.1} parent=1 // pred_check
      _
    $region19: #{tpu_custom_call.1} parent=1 // pred_check_branch
      %56 = sbr.rel (0) target = $region21
    $region20: #{tpu_custom_call.1} parent=1 // pred_region
      %s58 = ssub.s32 128, 128
      %59 = vsyncadd [#allocation4], %s58
      %s61 = sshll.u32 [#allocation7], 4
      %s62 = int_to_ptr.vmem [resolvable:$true] %s61
      %64 = dma.vmem_to_hbm [thread:$0]  %s62, 128, %s2, [#allocation4]
    $region21: #{tpu_custom_call.1} parent=1 // pred_fallthru
      _
    // Predicated region
    $region22: #{tpu_custom_call.1} parent=1 // pred_check
      _
    $region23: #{tpu_custom_call.1} parent=1 // pred_check_branch
      %66 = sbr.rel (0) target = $region25
    $region24: #{tpu_custom_call.1} parent=1 // pred_region
      %s68 = ssub.s32 128, 128
      %69 = vsyncadd [#allocation9], %s68
      %s71 = sshll.u32 [#allocation8], 4
      %s72 = int_to_ptr.vmem [resolvable:$true] %s71
      %74 = dma.vmem_to_hbm [thread:$0]  %s72, 128, %s3, [#allocation9]
    $region25: #{tpu_custom_call.1} parent=1 // pred_fallthru
      _
    // Predicated region
    $region26: #{tpu_custom_call.1} parent=1 // pred_check
      _
    $region27: #{tpu_custom_call.1} parent=1 // pred_check_branch
      %76 = sbr.rel (0) target = $region29
    $region28: #{tpu_custom_call.1} parent=1 // pred_region
      %77 = dma.done [#allocation4], 128
    $region29: #{tpu_custom_call.1} parent=1 // pred_fallthru
      _
    // Predicated region
    $region30: #{tpu_custom_call.1} parent=1 // pred_check
      _
    $region31: #{tpu_custom_call.1} parent=1 // pred_check_branch
      %79 = sbr.rel (0) target = $region33
    $region32: #{tpu_custom_call.1} parent=1 // pred_region
      %80 = dma.done [#allocation9], 128
    $region33: #{tpu_custom_call.1} parent=1 // pred_fallthru
      _
    %81 = vsyncpa [#allocation3], 1
    %82 = vsyncpa [#allocation6], 1
    %83 = vsyncpa [#allocation4], 1
    %84 = vsyncpa [#allocation9], 1

</llo_original>
